<compile_context>
chip_gen: v7x
topology: tpu7x:2x2x1
jax: 0.10.0
libtpu: 0.0.40
codegen_flags: <defaults>
</compile_context>

<pallas_src>
import functools

import jax
import jax.numpy as jnp
from jax.experimental import pallas as pl
from jax.experimental.pallas import tpu as pltpu


def _se_kernel(x_ref, w1_ref, b1_ref, w2_ref, b2_ref, o_ref, acc_ref,
               *, true_s, s_tile, channels_last):
    # x_ref: (1, s_tile, C) if channels_last else (1, C, s_tile)
    # w1_ref: (C, Ch)  b1_ref: (1, Ch)  w2_ref: (Ch, C)  b2_ref: (1, C)
    # o_ref: (1, 1, C)  acc_ref (scratch): (1, C) f32
    k = pl.program_id(1)

    @pl.when(k == 0)
    def _():
        # VMEM scratch is uninitialized and persists across grid steps.
        acc_ref[...] = jnp.zeros_like(acc_ref)

    xb = x_ref[...].astype(jnp.float32)
    spatial_axis = 1 if channels_last else 2

    if true_s % s_tile != 0:
        # Mask rows of the (possibly OOB-padded) last spatial tile.
        pos = jax.lax.broadcasted_iota(jnp.int32, xb.shape, spatial_axis)
        xb = jnp.where(pos < (true_s - k * s_tile), xb, 0.0)

    # Partial sum of this spatial chunk (f32 accumulation).
    acc_ref[...] += jnp.sum(xb, axis=spatial_axis)          # (1, C)

    @pl.when(k == pl.num_programs(1) - 1)
    def _():
        # Excitation runs once per sample, not per spatial chunk.
        pooled = acc_ref[...] * (1.0 / float(true_s))        # (1, C)
        h = jnp.dot(pooled, w1_ref[...],
                    preferred_element_type=jnp.float32) + b1_ref[...]
        h = jnp.maximum(h, 0.0)
        y = jnp.dot(h, w2_ref[...],
                    preferred_element_type=jnp.float32) + b2_ref[...]
        o_ref[...] = jax.nn.sigmoid(y)[:, None, :].astype(o_ref.dtype)


def _choose_s_tile(s, c, itemsize, channels_last):
    """Spatial tile sized for ~8 MiB per (double-buffered) x block."""
    budget = 8 * 1024 * 1024
    rows = max(1, budget // (c * itemsize))
    if rows >= s:
        return s                       # whole spatial extent fits in one block
    align = 8 if channels_last else 128  # sublane vs lane alignment
    tile = (rows // align) * align
    if tile <= 0:
        tile = s                       # degenerate corner (enormous C)
    return tile


def se_block(x, w1, b1, w2, b2, *, channels_last=None, s_tile=None):
    """x: (N, C, D, H, W). Returns (N, C, 1, 1, 1) gate values (x.dtype).

    w1: (hidden, C), b1: (hidden,), w2: (C, hidden), b2: (C,) — PyTorch
    nn.Linear conventions; transposed to (in, out) before entering the kernel.
    """
    n, c, d, h, w = x.shape
    s = d * h * w
    hidden = w1.shape[0]

    if channels_last is None:
        # Channels on the lane axis pays off for realistic C; for toy C << 128
        # keep channels on sublanes and reduce the flattened spatial lane axis.
        channels_last = c >= 128

    if channels_last:
        # (N, C, S) -> (N, S, C): pool becomes a VPU sublane accumulation and
        # the pooled / output (N, C) slabs are lane-dense.
        # TODO(synk): in a fused pipeline the producer conv would emit
        # channels-last directly; this XLA transpose costs one extra x pass.
        x_in = jnp.transpose(x.reshape(n, c, s), (0, 2, 1))
    else:
        x_in = x.reshape(n, c, s)      # free reshape, spatial on lanes

    if s_tile is None:
        s_tile = _choose_s_tile(s, c, x.dtype.itemsize, channels_last)
    num_k = pl.cdiv(s, s_tile)

    # Weights in (in, out) layout, f32, biases as (1, out) rows.
    w1_t = jnp.asarray(w1, jnp.float32).T           # (C, hidden)
    w2_t = jnp.asarray(w2, jnp.float32).T           # (hidden, C)
    b1_2d = jnp.asarray(b1, jnp.float32).reshape(1, hidden)
    b2_2d = jnp.asarray(b2, jnp.float32).reshape(1, c)

    if channels_last:
        x_spec = pl.BlockSpec((1, s_tile, c), lambda i, k: (i, k, 0))
    else:
        x_spec = pl.BlockSpec((1, c, s_tile), lambda i, k: (i, 0, k))

    const = lambda i, k: (0, 0)   # weights resident across all grid steps

    kernel = functools.partial(_se_kernel, true_s=s, s_tile=s_tile,
                               channels_last=channels_last)

    out = pl.pallas_call(
        kernel,
        out_shape=jax.ShapeDtypeStruct((n, 1, c), x.dtype),
        grid_spec=pltpu.PrefetchScalarGridSpec(
            num_scalar_prefetch=0,
            grid=(n, num_k),
            in_specs=[
                x_spec,
                pl.BlockSpec((c, hidden), const),
                pl.BlockSpec((1, hidden), const),
                pl.BlockSpec((hidden, c), const),
                pl.BlockSpec((1, c), const),
            ],
            out_specs=pl.BlockSpec((1, 1, c), lambda i, k: (i, 0, 0)),
            scratch_shapes=[pltpu.VMEM((1, c), jnp.float32)],
        ),
        compiler_params=pltpu.CompilerParams(
            # N shards across v7x's two TensorCores; S is the reduction axis.
            dimension_semantics=("parallel", "arbitrary"),
            # Portable across v5e/v6e (128 MiB) and v7x (64 MiB) VMEM.
            vmem_limit_bytes=48 * 1024 * 1024,
        ),
    )(x_in, w1_t, b1_2d, w2_t, b2_2d)

    return out.reshape(n, c, 1, 1, 1)


def _reference(x, w1, b1, w2, b2):
    pooled = jnp.mean(x.astype(jnp.float32), axis=(2, 3, 4))
    h = jnp.maximum(pooled @ jnp.asarray(w1, jnp.float32).T + b1, 0.0)
    y = jax.nn.sigmoid(h @ jnp.asarray(w2, jnp.float32).T + b2)
    return y.reshape(y.shape[0], y.shape[1], 1, 1, 1)


if __name__ == "__main__":
    key = jax.random.PRNGKey(0)
    k_x, k_w1, k_b1, k_w2, k_b2, k_x2 = jax.random.split(key, 6)

    # SEBlock(in_channels=8, r=4) -> hidden = round(8/4) = 2
    N, C, D, H, W = 2, 8, 4, 4, 4
    hidden = round(C / 4)

    x = jax.random.normal(k_x, (N, C, D, H, W), dtype=jnp.float32)
    w1 = jax.random.normal(k_w1, (hidden, C), dtype=jnp.float32) * 0.1
    b1 = jax.random.normal(k_b1, (hidden,), dtype=jnp.float32) * 0.1
    w2 = jax.random.normal(k_w2, (C, hidden), dtype=jnp.float32) * 0.1
    b2 = jax.random.normal(k_b2, (C,), dtype=jnp.float32) * 0.1

    y_ref = _reference(x, w1, b1, w2, b2)

    # 1) Default layout for toy C (<128): channels-first, single spatial block.
    y1 = se_block(x, w1, b1, w2, b2)
    jax.block_until_ready(y1)
    assert y1.shape == (N, C, 1, 1, 1), y1.shape
    assert jnp.allclose(y1, y_ref, atol=1e-5, rtol=1e-5), "mismatch (channels-first)"

    # 2) Channels-last layout with a small ragged spatial tile: exercises the
    #    multi-step pipelined accumulation + last-block masking path.
    y2 = se_block(x, w1, b1, w2, b2, channels_last=True, s_tile=24)
    jax.block_until_ready(y2)
    assert jnp.allclose(y2, y_ref, atol=1e-5, rtol=1e-5), "mismatch (channels-last ragged)"

    # 3) Larger spatial extent, channels-first, 128-lane tiles (4 grid steps).
    x2 = jax.random.normal(k_x2, (N, C, 8, 8, 8), dtype=jnp.float32)
    y3 = se_block(x2, w1, b1, w2, b2, channels_last=False, s_tile=128)
    jax.block_until_ready(y3)
    assert jnp.allclose(y3, _reference(x2, w1, b1, w2, b2),
                        atol=1e-5, rtol=1e-5), "mismatch (channels-first tiled)"

    # 4) bf16 activations: per-tile upcast, f32 accumulation, bf16 gate out.
    x_bf = x.astype(jnp.bfloat16)
    y4 = se_block(x_bf, w1, b1, w2, b2, channels_last=True)
    jax.block_until_ready(y4)
    assert y4.dtype == jnp.bfloat16
    assert jnp.allclose(y4.astype(jnp.float32), _reference(x_bf, w1, b1, w2, b2),
                        atol=2e-2, rtol=2e-2), "mismatch (bf16)"

    print("KERNEL_OK")
</pallas_src>

<mosaic_0001>
module attributes {stable_mosaic.version = 11 : i64} {
  func.func @_se_kernel(%arg0: i32, %arg1: i32, %arg2: memref<1x8x64xf32, #tpu.memory_space<vmem>>, %arg3: memref<8x2xf32, #tpu.memory_space<vmem>>, %arg4: memref<1x2xf32, #tpu.memory_space<vmem>>, %arg5: memref<2x8xf32, #tpu.memory_space<vmem>>, %arg6: memref<1x8xf32, #tpu.memory_space<vmem>>, %arg7: memref<1x1x8xf32, #tpu.memory_space<vmem>>, %arg8: memref<1x8xf32, #tpu.memory_space<vmem>>) attributes {dimension_semantics = [#tpu.dimension_semantics<parallel>, #tpu.dimension_semantics<arbitrary>], iteration_bounds = array<i64: 2, 1>, scalar_prefetch = 0 : i64, scratch_operands = 1 : i64, tpu.core_type = #tpu.core_type<tc>, window_params = [{transform_indices = @transform_0, window_bounds = array<i64: 1, 8, 64>}, {pipeline_mode = #tpu.pipeline_mode<synchronous>, transform_indices = @transform_1, window_bounds = array<i64: 8, 2>}, {pipeline_mode = #tpu.pipeline_mode<synchronous>, transform_indices = @transform_2, window_bounds = array<i64: 1, 2>}, {pipeline_mode = #tpu.pipeline_mode<synchronous>, transform_indices = @transform_3, window_bounds = array<i64: 2, 8>}, {pipeline_mode = #tpu.pipeline_mode<synchronous>, transform_indices = @transform_4, window_bounds = array<i64: 1, 8>}, {transform_indices = @transform_5, window_bounds = array<i64: 1, 1, 8>}]} {
    %c0_i32 = arith.constant 0 : i32
    %0 = arith.cmpi eq, %arg1, %c0_i32 : i32
    %1 = arith.extui %0 : i1 to i32
    %c0_i32_0 = arith.constant 0 : i32
    %2 = arith.cmpi ne, %1, %c0_i32_0 : i32
    scf.if %2 {
      %cst_9 = arith.constant 0.000000e+00 : f32
      %11 = vector.broadcast %cst_9 : f32 to vector<1x8xf32>
      %c0_10 = arith.constant 0 : index
      %c0_11 = arith.constant 0 : index
      %12 = vector.load %arg8[%c0_10, %c0_11] : memref<1x8xf32, #tpu.memory_space<vmem>>, vector<1x8xf32>
      tpu.vector_store %arg8[%c0_10, %c0_11], %11 {strides = array<i32>} : memref<1x8xf32, #tpu.memory_space<vmem>>, vector<1x8xf32>,
    } else {
    }
    %c0 = arith.constant 0 : index
    %c0_1 = arith.constant 0 : index
    %c0_2 = arith.constant 0 : index
    %3 = vector.load %arg2[%c0, %c0_1, %c0_2] : memref<1x8x64xf32, #tpu.memory_space<vmem>>, vector<1x8x64xf32>
    %c0_3 = arith.constant 0 : index
    %c0_4 = arith.constant 0 : index
    %4 = vector.load %arg8[%c0_3, %c0_4] : memref<1x8xf32, #tpu.memory_space<vmem>>, vector<1x8xf32>
    %cst = arith.constant dense<0.000000e+00> : vector<1x8xf32>
    %5 = vector.multi_reduction <add>, %3, %cst [2] : vector<1x8x64xf32> to vector<1x8xf32>
    %6 = arith.addf %4, %5 : vector<1x8xf32>
    %c0_5 = arith.constant 0 : index
    %c0_6 = arith.constant 0 : index
    %7 = vector.load %arg8[%c0_5, %c0_6] : memref<1x8xf32, #tpu.memory_space<vmem>>, vector<1x8xf32>
    tpu.vector_store %arg8[%c0_5, %c0_6], %6 {strides = array<i32>} : memref<1x8xf32, #tpu.memory_space<vmem>>, vector<1x8xf32>,
    %c0_i32_7 = arith.constant 0 : i32
    %8 = arith.cmpi eq, %arg1, %c0_i32_7 : i32
    %9 = arith.extui %8 : i1 to i32
    %c0_i32_8 = arith.constant 0 : i32
    %10 = arith.cmpi ne, %9, %c0_i32_8 : i32
    scf.if %10 {
      %c0_9 = arith.constant 0 : index
      %c0_10 = arith.constant 0 : index
      %11 = vector.load %arg8[%c0_9, %c0_10] : memref<1x8xf32, #tpu.memory_space<vmem>>, vector<1x8xf32>
      %cst_11 = arith.constant 1.562500e-02 : f32
      %12 = vector.broadcast %cst_11 : f32 to vector<1x8xf32>
      %13 = arith.mulf %11, %12 : vector<1x8xf32>
      %c0_12 = arith.constant 0 : index
      %c0_13 = arith.constant 0 : index
      %14 = vector.load %arg3[%c0_12, %c0_13] : memref<8x2xf32, #tpu.memory_space<vmem>>, vector<8x2xf32>
      %cst_14 = arith.constant dense<0.000000e+00> : vector<1x2xf32>
      %15 = tpu.matmul %13, %14, %cst_14 {dimension_numbers = #tpu.dot_dimension_numbers<[1], [0], [0], [1], [0, 0, 1, 1], [], []>} : vector<1x8xf32>, vector<8x2xf32>, vector<1x2xf32> -> vector<1x2xf32>
      %c0_15 = arith.constant 0 : index
      %c0_16 = arith.constant 0 : index
      %16 = vector.load %arg4[%c0_15, %c0_16] : memref<1x2xf32, #tpu.memory_space<vmem>>, vector<1x2xf32>
      %17 = arith.addf %15, %16 : vector<1x2xf32>
      %cst_17 = arith.constant 0.000000e+00 : f32
      %18 = vector.broadcast %cst_17 : f32 to vector<1x2xf32>
      %19 = arith.maximumf %17, %18 : vector<1x2xf32>
      %c0_18 = arith.constant 0 : index
      %c0_19 = arith.constant 0 : index
      %20 = vector.load %arg5[%c0_18, %c0_19] : memref<2x8xf32, #tpu.memory_space<vmem>>, vector<2x8xf32>
      %cst_20 = arith.constant dense<0.000000e+00> : vector<1x8xf32>
      %21 = tpu.matmul %19, %20, %cst_20 {dimension_numbers = #tpu.dot_dimension_numbers<[1], [0], [0], [1], [0, 0, 1, 1], [], []>} : vector<1x2xf32>, vector<2x8xf32>, vector<1x8xf32> -> vector<1x8xf32>
      %c0_21 = arith.constant 0 : index
      %c0_22 = arith.constant 0 : index
      %22 = vector.load %arg6[%c0_21, %c0_22] : memref<1x8xf32, #tpu.memory_space<vmem>>, vector<1x8xf32>
      %23 = arith.addf %21, %22 : vector<1x8xf32>
      %24 = arith.negf %23 : vector<1x8xf32>
      %25 = math.exp %24 : vector<1x8xf32>
      %cst_23 = arith.constant 1.000000e+00 : f32
      %26 = vector.broadcast %cst_23 : f32 to vector<1x8xf32>
      %27 = arith.addf %26, %25 : vector<1x8xf32>
      %28 = arith.divf %26, %27 : vector<1x8xf32>
      %29 = vector.shape_cast %28 : vector<1x8xf32> to vector<1x1x8xf32>
      %c0_24 = arith.constant 0 : index
      %c0_25 = arith.constant 0 : index
      %c0_26 = arith.constant 0 : index
      %30 = vector.load %arg7[%c0_24, %c0_25, %c0_26] : memref<1x1x8xf32, #tpu.memory_space<vmem>>, vector<1x1x8xf32>
      tpu.vector_store %arg7[%c0_24, %c0_25, %c0_26], %29 {strides = array<i32>} : memref<1x1x8xf32, #tpu.memory_space<vmem>>, vector<1x1x8xf32>,
    } else {
    }
    return
  }
  func.func @transform_0(%arg0: i32, %arg1: i32) -> (i32, i32, i32) {
    %c0_i32 = arith.constant 0 : i32
    %c0_i32_0 = arith.constant 0 : i32
    return %arg0, %c0_i32, %arg1 : i32, i32, i32
  }
  func.func @transform_1(%arg0: i32, %arg1: i32) -> (i32, i32) {
    %c0_i32 = arith.constant 0 : i32
    %c0_i32_0 = arith.constant 0 : i32
    %c0_i32_1 = arith.constant 0 : i32
    return %c0_i32, %c0_i32_0 : i32, i32
  }
  func.func @transform_2(%arg0: i32, %arg1: i32) -> (i32, i32) {
    %c0_i32 = arith.constant 0 : i32
    %c0_i32_0 = arith.constant 0 : i32
    %c0_i32_1 = arith.constant 0 : i32
    return %c0_i32, %c0_i32_0 : i32, i32
  }
  func.func @transform_3(%arg0: i32, %arg1: i32) -> (i32, i32) {
    %c0_i32 = arith.constant 0 : i32
    %c0_i32_0 = arith.constant 0 : i32
    %c0_i32_1 = arith.constant 0 : i32
    return %c0_i32, %c0_i32_0 : i32, i32
  }
  func.func @transform_4(%arg0: i32, %arg1: i32) -> (i32, i32) {
    %c0_i32 = arith.constant 0 : i32
    %c0_i32_0 = arith.constant 0 : i32
    %c0_i32_1 = arith.constant 0 : i32
    return %c0_i32, %c0_i32_0 : i32, i32
  }
  func.func @transform_5(%arg0: i32, %arg1: i32) -> (i32, i32, i32) {
    %c0_i32 = arith.constant 0 : i32
    %c0_i32_0 = arith.constant 0 : i32
    %c0_i32_1 = arith.constant 0 : i32
    return %arg0, %c0_i32, %c0_i32_0 : i32, i32, i32
  }
}

</mosaic_0001>

<llo_original>
// kernel: tpu_custom_call.1
$region0: #{tpu_custom_call.1}
  #allocation0 [shape = 'u32[]', space=smem, size = 0x4, offset = 0x4, fixed_abs, tag = 'smem constant byte address 0x4 - core index']
  #allocation1 [shape = 'u32[144,128]{1,0:T(1,128)}', space=vmem, size = 0x12000, scoped, tag = 'internal scratch']
  #allocation2 [shape = 'f32[1,8]{1,0:T(1,128)}', space=vmem, size = 0x200, scoped, tag = 'scratch operand']
  %s0 = inlined_call_operand.hbm [shape: f32[2,8,64], index: 0, kind: input, shape index: {}]
  %s1 = inlined_call_operand.vmem [shape: f32[8,2], index: 1, kind: input, shape index: {}]
  %s2 = inlined_call_operand.vmem [shape: f32[1,2], index: 2, kind: input, shape index: {}]
  %s3 = inlined_call_operand.vmem [shape: f32[2,8], index: 3, kind: input, shape index: {}]
  %s4 = inlined_call_operand.vmem [shape: f32[1,8], index: 4, kind: input, shape index: {}]
  %s5 = inlined_call_operand.hbm [shape: f32[2,1,8], index: 5, kind: output, shape index: {}]
  %s6 = sld [smem:[#allocation0]]
  $region65: #{tpu_custom_call.1} parent=0
    _
  %s8 = ssub.s32 1, %s6
  %s9 = scalar_select 0, %s8, %s6
  $region1: #{tpu_custom_call.1} parent=0
    #allocation3 [shape = 'u8[8192]{0}', space=vmem, size = 0x2000, scoped, tag = 'input window, operand 0']
    #allocation4 [shape = 's32[2]{0}', space=sflag, size = 0x8, scoped, tag = 'scoped memory for tpu_custom_call.1']
    #allocation5 [shape = 's32[2]{0}', space=sflag, size = 0x8, scoped, tag = 'scoped memory for tpu_custom_call.1']
    #allocation6 [shape = 'u8[1024]{0}', space=vmem, size = 0x400, scoped, tag = 'output window, operand 0']
    %10 = vsyncpa [#allocation4], 0
    %s11 = scalar_lea.sflag [#allocation4], 1
    %12 = vsyncpa %s11, 0
    %13 = vsyncpa [#allocation5], 0
    %s14 = scalar_lea.sflag [#allocation5], 1
    %15 = vsyncpa %s14, 0
    loop: start=0, step=1, limit=4
    $region2: #{tpu_custom_call.1} parent=1 // loop_pre_header
      _
    $region3: #{tpu_custom_call.1} parent=1 // loop_header
      %s17 = sphi 0, %s21
      %p18 = scmp.ge.s32.totalorder %s17, 4
      %s24 = sphi 0, %s36
      %s25 = sphi 0, %s32
      %s26 = sphi 0, %s24
      %s27 = sphi 0, %s25
      %s28 = sphi 0, %s26
      %s29 = sphi 0, %s27
      %s41 = sphi 0, %s43
      %s44 = sphi 0, %s41
      %s45 = sphi 0, %s44
      %s61 = sphi 0, %s45
      %s65 = sphi 0, %s65
      %s67 = sphi 0, %s65
      %s68 = sphi 0, %s67
      %s82 = sphi 0, %s68
      %s86 = sphi 0, %s86
      %s88 = sphi 0, %s86
      %s89 = sphi 0, %s88
      %s103 = sphi 0, %s89
      %s107 = sphi 0, %s107
      %s109 = sphi 0, %s107
      %s110 = sphi 0, %s109
      %s124 = sphi 0, %s110
      %s128 = sphi 0, %s128
      %s130 = sphi 0, %s128
      %s131 = sphi 0, %s130
      %s145 = sphi 0, %s131
      %s151 = sphi 0, %s153
      %s154 = sphi 0, %s151
      %s155 = sphi 0, %s154
      %s171 = sphi 0, %s155
    $region4: #{tpu_custom_call.1} parent=1 // loop_header_branch
      %20 = sbr.rel (%p18) target = $region8
    $region5: #{tpu_custom_call.1} parent=1 // loop_body
      %s22 = ssub.s32 %s17, 1
      %s23 = ssub.s32 %s17, 2
      %s30 = sadd.s32 1, %s25
      %p31 = scmp.ge.s32.totalorder %s30, 1
      %s32 = scalar_select %p31, 0, %s30
      %s33 = sadd.s32 1, %s24
      %s34 = scalar_select %p31, %s33, %s24
      %p35 = scmp.ge.s32.totalorder %s34, 2
      %s36 = scalar_select %p35, 0, %s34
      %s37 = ssub.s32 %s24, %s36
      %s38 = ssub.s32 %s25, %s32
      %s39 = sor.u32 %s37, %s38
      %p40 = scmp.eq.s32.totalorder %s39, 0
      %s42 = sadd.s32 %s41, 1
      %s43 = scalar_select %p40, %s41, %s42
      %p46 = pneg %p40
      %p47 = scmp.eq.s32.totalorder %s17, 1
      %p48 = por %p46, %p47
      %p49 = scmp.ne.s32.totalorder %s41, %s44
      %p50 = scmp.eq.s32.totalorder %s17, 0
      %p51 = por %p49, %p50
      %p52 = scmp.ne.s32.totalorder %s41, %s44
      %p53 = scmp.eq.s32.totalorder %s22, 1
      %p54 = por %p52, %p53
      %p55 = scmp.ne.s32.totalorder %s44, %s45
      %p56 = scmp.eq.s32.totalorder %s22, 0
      %p57 = por %p55, %p56
      %p58 = scmp.ne.s32.totalorder %s44, %s45
      %p59 = scmp.eq.s32.totalorder %s23, 1
      %p60 = por %p58, %p59
      %p62 = scmp.ne.s32.totalorder %s45, %s61
      %p63 = scmp.eq.s32.totalorder %s23, 0
      %p64 = por %p62, %p63
      %s66 = sadd.s32 %s65, 1
      %p69 = scmp.eq.s32.totalorder %s17, 1
      %p70 = scmp.ne.s32.totalorder %s65, %s67
      %p71 = scmp.eq.s32.totalorder %s17, 0
      %p72 = por %p70, %p71
      %p73 = scmp.ne.s32.totalorder %s65, %s67
      %p74 = scmp.eq.s32.totalorder %s22, 1
      %p75 = por %p73, %p74
      %p76 = scmp.ne.s32.totalorder %s67, %s68
      %p77 = scmp.eq.s32.totalorder %s22, 0
      %p78 = por %p76, %p77
      %p79 = scmp.ne.s32.totalorder %s67, %s68
      %p80 = scmp.eq.s32.totalorder %s23, 1
      %p81 = por %p79, %p80
      %p83 = scmp.ne.s32.totalorder %s68, %s82
      %p84 = scmp.eq.s32.totalorder %s23, 0
      %p85 = por %p83, %p84
      %s87 = sadd.s32 %s86, 1
      %p90 = scmp.eq.s32.totalorder %s17, 1
      %p91 = scmp.ne.s32.totalorder %s86, %s88
      %p92 = scmp.eq.s32.totalorder %s17, 0
      %p93 = por %p91, %p92
      %p94 = scmp.ne.s32.totalorder %s86, %s88
      %p95 = scmp.eq.s32.totalorder %s22, 1
      %p96 = por %p94, %p95
      %p97 = scmp.ne.s32.totalorder %s88, %s89
      %p98 = scmp.eq.s32.totalorder %s22, 0
      %p99 = por %p97, %p98
      %p100 = scmp.ne.s32.totalorder %s88, %s89
      %p101 = scmp.eq.s32.totalorder %s23, 1
      %p102 = por %p100, %p101
      %p104 = scmp.ne.s32.totalorder %s89, %s103
      %p105 = scmp.eq.s32.totalorder %s23, 0
      %p106 = por %p104, %p105
      %s108 = sadd.s32 %s107, 1
      %p111 = scmp.eq.s32.totalorder %s17, 1
      %p112 = scmp.ne.s32.totalorder %s107, %s109
      %p113 = scmp.eq.s32.totalorder %s17, 0
      %p114 = por %p112, %p113
      %p115 = scmp.ne.s32.totalorder %s107, %s109
      %p116 = scmp.eq.s32.totalorder %s22, 1
      %p117 = por %p115, %p116
      %p118 = scmp.ne.s32.totalorder %s109, %s110
      %p119 = scmp.eq.s32.totalorder %s22, 0
      %p120 = por %p118, %p119
      %p121 = scmp.ne.s32.totalorder %s109, %s110
      %p122 = scmp.eq.s32.totalorder %s23, 1
      %p123 = por %p121, %p122
      %p125 = scmp.ne.s32.totalorder %s110, %s124
      %p126 = scmp.eq.s32.totalorder %s23, 0
      %p127 = por %p125, %p126
      %s129 = sadd.s32 %s128, 1
      %p132 = scmp.eq.s32.totalorder %s17, 1
      %p133 = scmp.ne.s32.totalorder %s128, %s130
      %p134 = scmp.eq.s32.totalorder %s17, 0
      %p135 = por %p133, %p134
      %p136 = scmp.ne.s32.totalorder %s128, %s130
      %p137 = scmp.eq.s32.totalorder %s22, 1
      %p138 = por %p136, %p137
      %p139 = scmp.ne.s32.totalorder %s130, %s131
      %p140 = scmp.eq.s32.totalorder %s22, 0
      %p141 = por %p139, %p140
      %p142 = scmp.ne.s32.totalorder %s130, %s131
      %p143 = scmp.eq.s32.totalorder %s23, 1
      %p144 = por %p142, %p143
      %p146 = scmp.ne.s32.totalorder %s131, %s145
      %p147 = scmp.eq.s32.totalorder %s23, 0
      %p148 = por %p146, %p147
      %s149 = ssub.s32 %s24, %s36
      %p150 = scmp.eq.s32.totalorder %s149, 0
      %s152 = sadd.s32 %s151, 1
      %s153 = scalar_select %p150, %s151, %s152
      %p156 = pneg %p150
      %p157 = scmp.eq.s32.totalorder %s17, 1
      %p158 = por %p156, %p157
      %p159 = scmp.ne.s32.totalorder %s151, %s154
      %p160 = scmp.eq.s32.totalorder %s17, 0
      %p161 = por %p159, %p160
      %p162 = scmp.ne.s32.totalorder %s151, %s154
      %p163 = scmp.eq.s32.totalorder %s22, 1
      %p164 = por %p162, %p163
      %p165 = scmp.ne.s32.totalorder %s154, %s155
      %p166 = scmp.eq.s32.totalorder %s22, 0
      %p167 = por %p165, %p166
      %p168 = scmp.ne.s32.totalorder %s154, %s155
      %p169 = scmp.eq.s32.totalorder %s23, 1
      %p170 = por %p168, %p169
      %p172 = scmp.ne.s32.totalorder %s155, %s171
      %p173 = scmp.eq.s32.totalorder %s23, 0
      %p174 = por %p172, %p173
      %p175 = scmp.le.s32.totalorder 1, %s17
      %p176 = scmp.lt.s32.totalorder %s17, 3
      %p177 = pnand %p175, %p176
      %p178 = pneg %p177
      // Predicated region
      $region9: #{tpu_custom_call.1} parent=5 // pred_check
        _
      $region10: #{tpu_custom_call.1} parent=5 // pred_check_branch
        %180 = sbr.rel (%p177) target = $region12
      $region11: #{tpu_custom_call.1} parent=5 // pred_region
        %s181 = ssub.s32 %s17, 1
        // Predicated region
        $region13: #{tpu_custom_call.1} parent=11 // pred_check
          %p182 = pneg %p78
        $region14: #{tpu_custom_call.1} parent=11 // pred_check_branch
          %184 = sbr.rel (%p182) target = $region16
        $region15: #{tpu_custom_call.1} parent=11 // pred_region
          _
        $region16: #{tpu_custom_call.1} parent=11 // pred_fallthru
          _
        // Predicated region
        $region17: #{tpu_custom_call.1} parent=11 // pred_check
          %p185 = pneg %p99
        $region18: #{tpu_custom_call.1} parent=11 // pred_check_branch
          %187 = sbr.rel (%p185) target = $region20
        $region19: #{tpu_custom_call.1} parent=11 // pred_region
          _
        $region20: #{tpu_custom_call.1} parent=11 // pred_fallthru
          _
        // Predicated region
        $region21: #{tpu_custom_call.1} parent=11 // pred_check
          %p188 = pneg %p120
        $region22: #{tpu_custom_call.1} parent=11 // pred_check_branch
          %190 = sbr.rel (%p188) target = $region24
        $region23: #{tpu_custom_call.1} parent=11 // pred_region
          _
        $region24: #{tpu_custom_call.1} parent=11 // pred_fallthru
          _
        // Predicated region
        $region25: #{tpu_custom_call.1} parent=11 // pred_check
          %p191 = pneg %p141
        $region26: #{tpu_custom_call.1} parent=11 // pred_check_branch
          %193 = sbr.rel (%p191) target = $region28
        $region27: #{tpu_custom_call.1} parent=11 // pred_region
          _
        $region28: #{tpu_custom_call.1} parent=11 // pred_fallthru
          _
      $region12: #{tpu_custom_call.1} parent=5 // pred_fallthru
        _
      %p194 = scmp.lt.s32.totalorder %s17, 2
      // Predicated region
      $region29: #{tpu_custom_call.1} parent=5 // pred_check
        %p195 = pneg %p194
      $region30: #{tpu_custom_call.1} parent=5 // pred_check_branch
        %197 = sbr.rel (%p195) target = $region32
      $region31: #{tpu_custom_call.1} parent=5 // pred_region
        // Predicated region
        $region33: #{tpu_custom_call.1} parent=31 // pred_check
          %p198 = pneg %p51
        $region34: #{tpu_custom_call.1} parent=31 // pred_check_branch
          %200 = sbr.rel (%p198) target = $region36
        $region35: #{tpu_custom_call.1} parent=31 // pred_region
          %s201 = sand.u32 %s41, 1
          %s202 = scalar_lea.sflag [#allocation4], %s201
          %s203 = sand.u32 %s41, 1
          %s204 = smul.addr %s203, 8
          %s205 = scalar_lea.vmem [#allocation3], %s204
          %s207 = ssub.s32 128, 128
          %208 = vsyncadd %s202, %s207
          %s209 = sadd.s32 %s25, %s24
          %s210 = smul.addr %s209, 128
          %s211 = scalar_lea.hbm %s0, %s210
          %s213 = sshll.u32 %s205, 4
          %s214 = int_to_ptr.vmem [resolvable:$true] %s213
          %216 = dma.hbm_to_vmem [thread:$0]  %s211, 128, %s214, %s202
        $region36: #{tpu_custom_call.1} parent=31 // pred_fallthru
          _
      $region32: #{tpu_custom_call.1} parent=5 // pred_fallthru
        _
      %p217 = scmp.le.s32.totalorder 1, %s17
      %p218 = scmp.lt.s32.totalorder %s17, 3
      %p219 = pnand %p217, %p218
      %p220 = pneg %p219
      // Predicated region
      $region37: #{tpu_custom_call.1} parent=5 // pred_check
        _
      $region38: #{tpu_custom_call.1} parent=5 // pred_check_branch
        %222 = sbr.rel (%p219) target = $region40
      $region39: #{tpu_custom_call.1} parent=5 // pred_region
        %s223 = ssub.s32 %s17, 1
        %s224 = sand.u32 %s44, 1
        %s225 = scalar_lea.sflag [#allocation4], %s224
        %s226 = sand.u32 %s44, 1
        %s227 = smul.addr %s226, 8
        %s228 = scalar_lea.vmem [#allocation3], %s227
        // Predicated region
        $region41: #{tpu_custom_call.1} parent=39 // pred_check
          %p229 = pneg %p57
        $region42: #{tpu_custom_call.1} parent=39 // pred_check_branch
          %231 = sbr.rel (%p229) target = $region44
        $region43: #{tpu_custom_call.1} parent=39 // pred_region
          %232 = dma.done %s225, 128
        $region44: #{tpu_custom_call.1} parent=39 // pred_fallthru
          _
        %s233 = sand.u32 %s44, 1
        %s234 = scalar_lea.sflag [#allocation4], %s233
        %s235 = sand.u32 %s44, 1
        %s236 = smul.addr %s235, 8
        %s237 = scalar_lea.vmem [#allocation3], %s236
        %p238 = pneg %p57
        %p239 = pneg %p54
        %p240 = pneg %p78
        %p241 = pneg %p75
        %p242 = pneg %p99
        %p243 = pneg %p96
        %p244 = pneg %p120
        %p245 = pneg %p117
        %p246 = pneg %p141
        %p247 = pneg %p138
        %p248 = pneg %p167
        %p249 = pneg %p164
        %s250 = sand.u32 %s154, 1
        %s251 = scalar_lea.sflag [#allocation5], %s250
        %s252 = sand.u32 %s154, 1
        %s253 = scalar_lea.vmem [#allocation6], %s252
        %p254 = scmp.eq.s32.totalorder %s27, 0
        // Predicated region
        $region45: #{tpu_custom_call.1} parent=39 // pred_check
          %p255 = pneg %p254
        $region46: #{tpu_custom_call.1} parent=39 // pred_check_branch
          %257 = sbr.rel (%p255) target = $region48
        $region47: #{tpu_custom_call.1} parent=39 // pred_region
          %vm258 = vcmask 57344
          %259 = vst.msk [vmem:[#allocation2] sm:$0x1] %vm258, 0.0
        $region48: #{tpu_custom_call.1} parent=39 // pred_fallthru
          _
        %v260 = vld [vmem:[%s228] sm:$0xff]
        %v261 = vld [vmem:[#allocation2] sm:$0x1]
        %vm262 = vcmask 523264
        %v263 = vsel %vm262, %v260, 0.0
        %264 = vadd.xlane.f32.xlu0 %v263
        %v265 = vpop.xlane.xlu0 %264
        %v267 = vlaneseq
        %v268 = vshrl.u32 %v267, 7
        %v269 = vsub.s32 0, %v268
        %v270 = vrot.slane %v265, %v269
        %v271 = vlaneseq
        %v272 = vshrl.u32 %v271, 7
        %v273 = vsub.s32 1, %v272
        %v274 = vrot.slane %v265, %v273
        %v275 = vlaneseq
        %v276 = vshrl.u32 %v275, 7
        %v277 = vsub.s32 2, %v276
        %v278 = vrot.slane %v265, %v277
        %v279 = vlaneseq
        %v280 = vshrl.u32 %v279, 7
        %v281 = vsub.s32 3, %v280
        %v282 = vrot.slane %v265, %v281
        %v283 = vlaneseq
        %v284 = vshrl.u32 %v283, 7
        %v285 = vsub.s32 4, %v284
        %v286 = vrot.slane %v265, %v285
        %v287 = vlaneseq
        %v288 = vshrl.u32 %v287, 7
        %v289 = vsub.s32 5, %v288
        %v290 = vrot.slane %v265, %v289
        %v291 = vlaneseq
        %v292 = vshrl.u32 %v291, 7
        %v293 = vsub.s32 6, %v292
        %v294 = vrot.slane %v265, %v293
        %v295 = vlaneseq
        %v296 = vshrl.u32 %v295, 7
        %v297 = vsub.s32 7, %v296
        %v298 = vrot.slane %v265, %v297
        %v299 = vcombine.low %v270, %v274
        %v300 = vcombine.low %v278, %v282
        %v301 = vcombine.low %v286, %v290
        %v302 = vcombine.low %v294, %v298
        %v304 = vunpack.c.l.s4 1966171168
        %v305 = vunpack.c.0.s8 %v304
        %v306 = vlaneseq
        %v307 = vshrl.u32 %v306, 7
        %v308 = vsub.s32 %v305, %v307
        %v309 = vrot.slane %v299, %v308
        %v311 = vunpack.c.l.s4 1966171168
        %v312 = vunpack.c.0.s8 %v311
        %v313 = vlaneseq
        %v314 = vshrl.u32 %v313, 7
        %v315 = vsub.s32 %v312, %v314
        %v316 = vrot.slane %v300, %v315
        %v318 = vunpack.c.l.s4 1966171168
        %v319 = vunpack.c.0.s8 %v318
        %v320 = vlaneseq
        %v321 = vshrl.u32 %v320, 7
        %v322 = vsub.s32 %v319, %v321
        %v323 = vrot.slane %v301, %v322
        %v325 = vunpack.c.l.s4 1966171168
        %v326 = vunpack.c.0.s8 %v325
        %v327 = vlaneseq
        %v328 = vshrl.u32 %v327, 7
        %v329 = vsub.s32 %v326, %v328
        %v330 = vrot.slane %v302, %v329
        %v331 = vcombine.low %v309, %v316
        %v332 = vcombine.low %v323, %v330
        %v334 = vunpack.c.l.s4 1966171168
        %v335 = vunpack.c.0.s8 %v334
        %v336 = vlaneseq
        %v337 = vshrl.u32 %v336, 7
        %v338 = vsub.s32 %v335, %v337
        %v339 = vrot.slane %v331, %v338
        %v341 = vunpack.c.l.s4 1966171168
        %v342 = vunpack.c.0.s8 %v341
        %v343 = vlaneseq
        %v344 = vshrl.u32 %v343, 7
        %v345 = vsub.s32 %v342, %v344
        %v346 = vrot.slane %v332, %v345
        %v347 = vcombine.low %v339, %v346
        %348 = vset.pattern.permute.xlu0 0
        %349 = vperm.xlu0 %348, %v347
        %v350 = vpop.permute.xlu0 %349
        %v351 = vlaneseq
        %v352 = vand.u32 %v351, 127
        %v353 = vlaneseq
        %v354 = vshrl.u32 %v353, 7
        %v355 = vsub.s32 %v352, %v354
        %v356 = vrot.slane %v350, %v355
        %v358 = vunpack.c.l.s4 1966171168
        %v359 = vunpack.c.0.s8 %v358
        %v360 = vlaneseq
        %v361 = vshrl.u32 %v360, 7
        %v362 = vsub.s32 %v359, %v361
        %v363 = vrot.slane %v356, %v362
        %v365 = vunpack.c.l.s4 1966171168
        %v366 = vunpack.c.0.s8 %v365
        %v367 = vlaneseq
        %v368 = vshrl.u32 %v367, 7
        %v369 = vsub.s32 %v366, %v368
        %v370 = vrot.slane %v363, %v369
        %v372 = vadd.f32 %v261, %v370
        %vm373 = vcmask 57344
        %374 = vst.msk [vmem:[#allocation2] sm:$0x1] %vm373, %v372
        // Predicated region
        $region49: #{tpu_custom_call.1} parent=39 // pred_check
          %p375 = pneg %p254
        $region50: #{tpu_custom_call.1} parent=39 // pred_check_branch
          %377 = sbr.rel (%p375) target = $region52
        $region51: #{tpu_custom_call.1} parent=39 // pred_region
          %v378 = vld [vmem:[#allocation2] sm:$0x1]
          %v379 = vmul.f32 %v378, 0.015625
          %v380 = vld [vmem:[%s1] sm:$0xff]
          %v381 = vld [vmem:[%s2] sm:$0x1]
          %vm382 = vcmask 64512
          %v384 = vsel %vm382, %v379, 0
          %386 = vmatprep.subr.mxu0 0.0
          %387 = vmatpush1.msra.mxu0 %v380
          %388 = vmatprep.subr.mxu0 0.0
          %389 = vmatpush1.msra.mxu0 0.0
          %390 = vmatprep.subr.mxu0 0.0
          %391 = vmatpush1.msra.mxu0 0.0
          %392 = vmatprep.subr.mxu0 0.0
          %393 = vmatpush1.msra.mxu0 0.0
          %394 = vmatprep.subr.mxu0 0.0
          %395 = vmatpush1.msra.mxu0 0.0
          %396 = vmatprep.subr.mxu0 0.0
          %397 = vmatpush1.msra.mxu0 0.0
          %398 = vmatprep.subr.mxu0 0.0
          %399 = vmatpush1.msra.mxu0 0.0
          %400 = vmatprep.subr.mxu0 0.0
          %401 = vmatpush1.msra.mxu0 0.0
          %402 = vmatprep.subr.mxu0 0.0
          %403 = vmatpush1.msra.mxu0 0.0
          %404 = vmatprep.subr.mxu0 0.0
          %405 = vmatpush1.msra.mxu0 0.0
          %406 = vmatprep.subr.mxu0 0.0
          %407 = vmatpush1.msra.mxu0 0.0
          %408 = vmatprep.subr.mxu0 0.0
          %409 = vmatpush1.msra.mxu0 0.0
          %410 = vmatprep.subr.mxu0 0.0
          %411 = vmatpush1.msra.mxu0 0.0
          %412 = vmatprep.subr.mxu0 0.0
          %413 = vmatpush1.msra.mxu0 0.0
          %414 = vmatprep.subr.mxu0 0.0
          %415 = vmatpush1.msra.mxu0 0.0
          %416 = vmatprep.subr.mxu0 0.0
          %417 = vmatpush1.msra.mxu0 0.0
          %418 = vmatprep.subr.mxu0 0.0
          %419 = vmatpush1.msra.mxu0 0.0
          %420 = vmatprep.subr.mxu0 0.0
          %421 = vmatpush1.msra.mxu0 0.0
          %422 = vmatprep.subr.mxu0 0.0
          %423 = vmatpush1.msra.mxu0 0.0
          %424 = vmatprep.subr.mxu0 0.0
          %425 = vmatpush1.msra.mxu0 0.0
          %426 = vmatprep.subr.mxu0 0.0
          %427 = vmatpush1.msra.mxu0 0.0
          %428 = vmatprep.subr.mxu0 0.0
          %429 = vmatpush1.msra.mxu0 0.0
          %430 = vmatprep.subr.mxu0 0.0
          %431 = vmatpush1.msra.mxu0 0.0
          %432 = vmatprep.subr.mxu0 0.0
          %433 = vmatpush1.msra.mxu0 0.0
          %434 = vmatprep.subr.mxu0 0.0
          %435 = vmatpush1.msra.mxu0 0.0
          %436 = vmatprep.subr.mxu0 0.0
          %437 = vmatpush1.msra.mxu0 0.0
          %438 = vmatprep.subr.mxu0 0.0
          %439 = vmatpush1.msra.mxu0 0.0
          %440 = vmatprep.subr.mxu0 0.0
          %441 = vmatpush1.msra.mxu0 0.0
          %442 = vmatprep.subr.mxu0 0.0
          %443 = vmatpush1.msra.mxu0 0.0
          %444 = vmatprep.subr.mxu0 0.0
          %445 = vmatpush1.msra.mxu0 0.0
          %446 = vmatprep.subr.mxu0 0.0
          %447 = vmatpush1.msra.mxu0 0.0
          %448 = vmatprep.subr.mxu0 0.0
          %449 = vmatpush1.msra.mxu0 0.0
          %450 = vmatprep.mubr.f32.mxu0 0.0
          %451 = vmatmul.mubr.f32.gmra.mrb[0].mxu0 %v384
          %v452 = vpop.f32.mrb[0].mxu0
          %v453 = vadd.f32 %v381, %v452
          %v454 = vpop.f32.mrb[0].mxu0
          %455 = vdwg.mxu0
          %v456 = vmax.f32 %v453, 0.0
          %v457 = vld [vmem:[%s3] sm:$0x3]
          %v458 = vld [vmem:[%s4] sm:$0x1]
          %vm459 = vcmask 15360
          %v461 = vsel %vm459, %v456, 0
          %vm463 = vcmask 1041408
          %v465 = vsel %vm463, %v457, 0
          %467 = vmatprep.subr.mxu0 0.0
          %468 = vmatpush1.msra.mxu0 %v465
          %469 = vmatprep.subr.mxu0 0.0
          %470 = vmatpush1.msra.mxu0 0.0
          %471 = vmatprep.subr.mxu0 0.0
          %472 = vmatpush1.msra.mxu0 0.0
          %473 = vmatprep.subr.mxu0 0.0
          %474 = vmatpush1.msra.mxu0 0.0
          %475 = vmatprep.subr.mxu0 0.0
          %476 = vmatpush1.msra.mxu0 0.0
          %477 = vmatprep.subr.mxu0 0.0
          %478 = vmatpush1.msra.mxu0 0.0
          %479 = vmatprep.subr.mxu0 0.0
          %480 = vmatpush1.msra.mxu0 0.0
          %481 = vmatprep.subr.mxu0 0.0
          %482 = vmatpush1.msra.mxu0 0.0
          %483 = vmatprep.subr.mxu0 0.0
          %484 = vmatpush1.msra.mxu0 0.0
          %485 = vmatprep.subr.mxu0 0.0
          %486 = vmatpush1.msra.mxu0 0.0
          %487 = vmatprep.subr.mxu0 0.0
          %488 = vmatpush1.msra.mxu0 0.0
          %489 = vmatprep.subr.mxu0 0.0
          %490 = vmatpush1.msra.mxu0 0.0
          %491 = vmatprep.subr.mxu0 0.0
          %492 = vmatpush1.msra.mxu0 0.0
          %493 = vmatprep.subr.mxu0 0.0
          %494 = vmatpush1.msra.mxu0 0.0
          %495 = vmatprep.subr.mxu0 0.0
          %496 = vmatpush1.msra.mxu0 0.0
          %497 = vmatprep.subr.mxu0 0.0
          %498 = vmatpush1.msra.mxu0 0.0
          %499 = vmatprep.subr.mxu0 0.0
          %500 = vmatpush1.msra.mxu0 0.0
          %501 = vmatprep.subr.mxu0 0.0
          %502 = vmatpush1.msra.mxu0 0.0
          %503 = vmatprep.subr.mxu0 0.0
          %504 = vmatpush1.msra.mxu0 0.0
          %505 = vmatprep.subr.mxu0 0.0
          %506 = vmatpush1.msra.mxu0 0.0
          %507 = vmatprep.subr.mxu0 0.0
          %508 = vmatpush1.msra.mxu0 0.0
          %509 = vmatprep.subr.mxu0 0.0
          %510 = vmatpush1.msra.mxu0 0.0
          %511 = vmatprep.subr.mxu0 0.0
          %512 = vmatpush1.msra.mxu0 0.0
          %513 = vmatprep.subr.mxu0 0.0
          %514 = vmatpush1.msra.mxu0 0.0
          %515 = vmatprep.subr.mxu0 0.0
          %516 = vmatpush1.msra.mxu0 0.0
          %517 = vmatprep.subr.mxu0 0.0
          %518 = vmatpush1.msra.mxu0 0.0
          %519 = vmatprep.subr.mxu0 0.0
          %520 = vmatpush1.msra.mxu0 0.0
          %521 = vmatprep.subr.mxu0 0.0
          %522 = vmatpush1.msra.mxu0 0.0
          %523 = vmatprep.subr.mxu0 0.0
          %524 = vmatpush1.msra.mxu0 0.0
          %525 = vmatprep.subr.mxu0 0.0
          %526 = vmatpush1.msra.mxu0 0.0
          %527 = vmatprep.subr.mxu0 0.0
          %528 = vmatpush1.msra.mxu0 0.0
          %529 = vmatprep.subr.mxu0 0.0
          %530 = vmatpush1.msra.mxu0 0.0
          %531 = vmatprep.mubr.f32.mxu0 0.0
          %532 = vmatmul.mubr.f32.gmra.mrb[0].mxu0 %v461
          %v533 = vpop.f32.mrb[0].mxu0
          %v534 = vadd.f32 %v458, %v533
          %v535 = vpop.f32.mrb[0].mxu0
          %536 = vdwg.mxu0
          %v537 = vxor.u32 %v534, 2147483648
          %v538 = vmul.f32 %v537, 1.442695
          %v539 = vpow.pop %v538
          %v540 = vadd.f32 %v539, 1.0
          %v541 = vrcp.pop %v540
          %v542 = vmul.f32 1.0, %v541
          %543 = vst.msk [vmem:[%s253] sm:$0x1] %vm373, %v542
        $region52: #{tpu_custom_call.1} parent=39 // pred_fallthru
          _
        %s544 = sand.u32 %s154, 1
        %s545 = scalar_lea.sflag [#allocation5], %s544
        %s546 = sand.u32 %s154, 1
        %s547 = scalar_lea.vmem [#allocation6], %s546
        // Predicated region
        $region53: #{tpu_custom_call.1} parent=39 // pred_check
          %p548 = pneg %p164
        $region54: #{tpu_custom_call.1} parent=39 // pred_check_branch
          %550 = sbr.rel (%p548) target = $region56
        $region55: #{tpu_custom_call.1} parent=39 // pred_region
          %s552 = ssub.s32 16, 16
          %553 = vsyncadd %s545, %s552
          %s554 = smul.addr %s26, 16
          %s555 = scalar_lea.hbm %s5, %s554
          %s557 = sshll.u32 %s547, 4
          %s558 = int_to_ptr.vmem [resolvable:$true] %s557
          %560 = dma.vmem_to_hbm [thread:$0]  %s558, 16, %s555, %s545
        $region56: #{tpu_custom_call.1} parent=39 // pred_fallthru
          _
      $region40: #{tpu_custom_call.1} parent=5 // pred_fallthru
        _
      %p561 = scmp.le.s32.totalorder 2, %s17
      // Predicated region
      $region57: #{tpu_custom_call.1} parent=5 // pred_check
        %p562 = pneg %p561
      $region58: #{tpu_custom_call.1} parent=5 // pred_check_branch
        %564 = sbr.rel (%p562) target = $region60
      $region59: #{tpu_custom_call.1} parent=5 // pred_region
        %s565 = ssub.s32 %s17, 2
        // Predicated region
        $region61: #{tpu_custom_call.1} parent=59 // pred_check
          %p566 = pneg %p170
        $region62: #{tpu_custom_call.1} parent=59 // pred_check_branch
          %568 = sbr.rel (%p566) target = $region64
        $region63: #{tpu_custom_call.1} parent=59 // pred_region
          %s569 = sand.u32 %s155, 1
          %s570 = scalar_lea.sflag [#allocation5], %s569
          %s571 = sand.u32 %s155, 1
          %s572 = scalar_lea.vmem [#allocation6], %s571
          %573 = dma.done %s570, 16
        $region64: #{tpu_custom_call.1} parent=59 // pred_fallthru
          _
      $region60: #{tpu_custom_call.1} parent=5 // pred_fallthru
        _
    $region6: #{tpu_custom_call.1} parent=1 // loop_footer
      %s21 = sadd.s32 1, %s17
    $region7: #{tpu_custom_call.1} parent=1 // loop_footer_branch
      %16 = sbr.rel target = $region3
    $region8: #{tpu_custom_call.1} parent=1 // loop_exit
      _
    %574 = vsyncpa [#allocation4], 1
    %s575 = scalar_lea.sflag [#allocation4], 1
    %576 = vsyncpa %s575, 1
    %577 = vsyncpa [#allocation5], 1
    %s578 = scalar_lea.sflag [#allocation5], 1
    %579 = vsyncpa %s578, 1

</llo_original>
